<compile_context>
chip_gen: v6e
topology: v6e:2x2x1
jax: 0.10.0
libtpu: 0.0.40
codegen_flags: <defaults>
</compile_context>

<pallas_src>
import functools
import math

import jax
import jax.numpy as jnp
from jax import lax
from jax.experimental import pallas as pl
from jax.experimental.pallas import tpu as pltpu


# ----------------------------------------------------------------------------
# Tiled linear:  y = x @ W^T   with W kept in torch (out, in) layout.
# Grid (M/tm, N/tn, K/tk), f32 VMEM accumulator, K axis innermost/"arbitrary".
# ----------------------------------------------------------------------------
def _linear_kernel(x_ref, w_ref, o_ref, acc_ref):
    @pl.when(pl.program_id(2) == 0)
    def _():
        acc_ref[...] = jnp.zeros_like(acc_ref)

    # x: (tm, tk), w: (tn, tk)  -> (tm, tn). Contract dim 1 of BOTH operands:
    # no weight transpose outside and no in-kernel transpose either.
    acc_ref[...] += lax.dot_general(
        x_ref[...], w_ref[...],
        dimension_numbers=(((1,), (1,)), ((), ())),
        preferred_element_type=jnp.float32,
    )

    @pl.when(pl.program_id(2) == pl.num_programs(2) - 1)
    def _():
        o_ref[...] = acc_ref[...].astype(o_ref.dtype)


def _pick_tile(dim, target):
    """Largest clean tile: `target` if it divides `dim`, else the full dim."""
    if dim <= target or dim % target != 0:
        return dim
    return target


def linear(x, weight, *, tm=256, tn=256, tk=512):
    """y = x @ weight.T  (torch nn.Linear semantics, no bias).

    x:      (M, K)
    weight: (N, K)   -- torch layout, never transposed in HBM
    """
    M, K = x.shape
    N, K2 = weight.shape
    assert K == K2
    tm = _pick_tile(M, tm)
    tn = _pick_tile(N, tn)
    tk = _pick_tile(K, tk)
    grid = (M // tm, N // tn, K // tk)

    itemsize = jnp.dtype(x.dtype).itemsize
    cost = pl.CostEstimate(
        flops=2 * M * N * K,
        transcendentals=0,
        bytes_accessed=(M * K + N * K + M * N) * itemsize,
    )

    return pl.pallas_call(
        _linear_kernel,
        out_shape=jax.ShapeDtypeStruct((M, N), x.dtype),
        grid_spec=pltpu.PrefetchScalarGridSpec(
            num_scalar_prefetch=0,
            grid=grid,
            in_specs=[
                pl.BlockSpec((tm, tk), lambda i, j, k: (i, k)),
                pl.BlockSpec((tn, tk), lambda i, j, k: (j, k)),
            ],
            out_specs=pl.BlockSpec((tm, tn), lambda i, j, k: (i, j)),
            scratch_shapes=[pltpu.VMEM((tm, tn), jnp.float32)],
        ),
        compiler_params=pltpu.CompilerParams(
            dimension_semantics=("parallel", "parallel", "arbitrary"),
            vmem_limit_bytes=32 * 1024 * 1024,
        ),
        cost_estimate=cost,
    )(x, weight)


# ----------------------------------------------------------------------------
# Flash-style attention with GQA folded into the index_map.
# Grid (B, H, S/tq, S/tkv), KV axis innermost/"arbitrary"; running max /
# denominator / accumulator live in VMEM scratch; only (tq x tkv) mask tiles
# are ever resident, so VMEM is bounded O(tq*tkv + tq*D) regardless of S.
# ----------------------------------------------------------------------------
def _flash_attn_kernel(q_ref, k_ref, v_ref, mask_ref, o_ref,
                       m_scr, l_scr, acc_scr, *, sm_scale):
    kv_idx = pl.program_id(3)

    @pl.when(kv_idx == 0)
    def _():
        m_scr[...] = jnp.full_like(m_scr, -jnp.inf)
        l_scr[...] = jnp.zeros_like(l_scr)
        acc_scr[...] = jnp.zeros_like(acc_scr)

    # scores: contract the last dims of q (tq, D) and k (tkv, D) -> (tq, tkv);
    # no k.T inside the kernel (keeps the XLU slot free), f32 MXU accumulation.
    s = lax.dot_general(
        q_ref[...], k_ref[...],
        dimension_numbers=(((1,), (1,)), ((), ())),
        preferred_element_type=jnp.float32,
    )
    s = s * sm_scale + mask_ref[...].astype(jnp.float32)

    m_prev = m_scr[...]
    m_new = jnp.maximum(m_prev, jnp.max(s, axis=-1, keepdims=True))
    alpha = jnp.exp(m_prev - m_new)
    p = jnp.exp(s - m_new)
    l_scr[...] = alpha * l_scr[...] + jnp.sum(p, axis=-1, keepdims=True)
    # cast probabilities back to V's dtype so P@V stays on the fast MXU path
    # when activations are bf16 (accumulation remains f32).
    acc_scr[...] = alpha * acc_scr[...] + lax.dot_general(
        p.astype(v_ref.dtype), v_ref[...],
        dimension_numbers=(((1,), (0,)), ((), ())),
        preferred_element_type=jnp.float32,
    )
    m_scr[...] = m_new

    @pl.when(kv_idx == pl.num_programs(3) - 1)
    def _():
        o_ref[...] = (acc_scr[...] *
                      pl.reciprocal(l_scr[...], approx=True)).astype(o_ref.dtype)


def flash_attention(qkv, attn_mask, *, num_heads, num_kv_heads, head_dim,
                    block_q=128, block_kv=128):
    """Attention reading Q/K/V directly from the packed fused-projection output.

    qkv:       (B, S, (num_heads + 2*num_kv_heads) * head_dim)
    attn_mask: (B, 1, S, S) additive mask (float32)
    returns:   (B, S, num_heads * head_dim)   -- lane-dense, no transposes
    """
    B, S, packed = qkv.shape
    assert packed == (num_heads + 2 * num_kv_heads) * head_dim
    groups = num_heads // num_kv_heads
    # Lane-offset head indexing needs a 128-aligned head_dim (true for Llama).
    # TODO(synk): add a (B, H, S, D) fallback layout for head_dim not a multiple of 128.
    assert head_dim % 128 == 0, "head_dim must be a multiple of 128 for the lane-offset path"

    tq = _pick_tile(S, block_q)
    tkv = _pick_tile(S, block_kv)
    grid = (B, num_heads, S // tq, S // tkv)
    sm_scale = 1.0 / math.sqrt(head_dim)

    # head h -> block index (i.e. lane offset / head_dim) into the packed last axis
    q_index = lambda b, h, qi, ki: (b, qi, h)
    k_index = lambda b, h, qi, ki: (b, ki, num_heads + h // groups)
    v_index = lambda b, h, qi, ki: (b, ki, num_heads + num_kv_heads + h // groups)
    mask_index = lambda b, h, qi, ki: (b, 0, qi, ki)
    out_index = lambda b, h, qi, ki: (b, qi, h)

    itemsize = jnp.dtype(qkv.dtype).itemsize
    cost = pl.CostEstimate(
        flops=4 * B * num_heads * S * S * head_dim,
        transcendentals=B * num_heads * S * S,
        bytes_accessed=(qkv.size + attn_mask.size
                        + B * S * num_heads * head_dim) * itemsize,
    )

    kernel = functools.partial(_flash_attn_kernel, sm_scale=sm_scale)

    return pl.pallas_call(
        kernel,
        out_shape=jax.ShapeDtypeStruct((B, S, num_heads * head_dim), qkv.dtype),
        grid_spec=pltpu.PrefetchScalarGridSpec(
            num_scalar_prefetch=0,
            grid=grid,
            in_specs=[
                pl.BlockSpec((None, tq, head_dim), q_index),
                pl.BlockSpec((None, tkv, head_dim), k_index),
                pl.BlockSpec((None, tkv, head_dim), v_index),
                pl.BlockSpec((None, None, tq, tkv), mask_index),
            ],
            out_specs=pl.BlockSpec((None, tq, head_dim), out_index),
            scratch_shapes=[
                pltpu.VMEM((tq, 1), jnp.float32),         # running max
                pltpu.VMEM((tq, 1), jnp.float32),         # running denominator
                pltpu.VMEM((tq, head_dim), jnp.float32),  # output accumulator
            ],
        ),
        compiler_params=pltpu.CompilerParams(
            dimension_semantics=("parallel", "parallel", "parallel", "arbitrary"),
            vmem_limit_bytes=32 * 1024 * 1024,
        ),
        cost_estimate=cost,
    )(qkv, qkv, qkv, attn_mask)


# ----------------------------------------------------------------------------
# LlamaAttention forward (Pallas)
# ----------------------------------------------------------------------------
def fuse_qkv_weights(q_w, k_w, v_w):
    # Done once at parameter-load time (torch (out, in) layout kept).
    return jnp.concatenate([q_w, k_w, v_w], axis=0)


def llama_attention_forward(hidden_states, attention_mask, params, cfg):
    """hidden_states: (B, S, hidden) ; attention_mask: (B, 1, S, S) additive or None.

    Returns (B, S, hidden). No RoPE (the module never applies it in forward),
    no KV cache, no dropout (attention_dropout defaults to 0 and is unused here).
    """
    B, S, H = hidden_states.shape
    num_heads = cfg["num_attention_heads"]
    num_kv_heads = cfg["num_key_value_heads"]
    head_dim = H // num_heads

    x2d = hidden_states.reshape(B * S, H)

    # Single fused QKV GEMM: x is read from HBM once, one kernel launch.
    qkv = linear(x2d, params["qkv_proj"])            # (B*S, (nH + 2*nKV) * D)
    qkv = qkv.reshape(B, S, -1)                      # metadata-only reshape

    if attention_mask is None:
        attention_mask = jnp.zeros((B, 1, S, S), dtype=jnp.float32)

    attn_out = flash_attention(
        qkv, attention_mask,
        num_heads=num_heads, num_kv_heads=num_kv_heads, head_dim=head_dim,
    )                                                # (B, S, nH*D), lane-dense

    out = linear(attn_out.reshape(B * S, num_heads * head_dim), params["o_proj"])
    return out.reshape(B, S, H)


# ----------------------------------------------------------------------------
# Pure-JAX reference (correctness check, mirrors the torch module exactly)
# ----------------------------------------------------------------------------
def reference_forward(hidden_states, attention_mask, params, cfg):
    B, S, H = hidden_states.shape
    num_heads = cfg["num_attention_heads"]
    num_kv_heads = cfg["num_key_value_heads"]
    head_dim = H // num_heads
    groups = num_heads // num_kv_heads

    q = hidden_states @ params["q_proj"].T
    k = hidden_states @ params["k_proj"].T
    v = hidden_states @ params["v_proj"].T
    q = q.reshape(B, S, num_heads, head_dim).transpose(0, 2, 1, 3)
    k = k.reshape(B, S, num_kv_heads, head_dim).transpose(0, 2, 1, 3)
    v = v.reshape(B, S, num_kv_heads, head_dim).transpose(0, 2, 1, 3)
    k = jnp.repeat(k, groups, axis=1)                    # repeat_kv
    v = jnp.repeat(v, groups, axis=1)
    scores = jnp.einsum("bhqd,bhkd->bhqk", q, k) / math.sqrt(head_dim)
    scores = scores + attention_mask
    probs = jax.nn.softmax(scores.astype(jnp.float32), axis=-1).astype(q.dtype)
    attn = jnp.einsum("bhqk,bhkd->bhqd", probs, v)
    attn = attn.transpose(0, 2, 1, 3).reshape(B, S, H)
    return attn @ params["o_proj"].T


# ----------------------------------------------------------------------------
# Main
# ----------------------------------------------------------------------------
if __name__ == "__main__":
    # Small-but-TPU-aligned SUMAConfig-like configuration (head_dim = 128 as in
    # real Llama, GQA with 2 query heads per KV head).
    cfg = dict(
        hidden_size=256,
        num_attention_heads=2,
        num_key_value_heads=1,
        attention_bias=False,
    )
    B, S = 2, 16
    H = cfg["hidden_size"]
    num_heads = cfg["num_attention_heads"]
    num_kv_heads = cfg["num_key_value_heads"]
    head_dim = H // num_heads
    init_std = 0.02

    key = jax.random.PRNGKey(0)
    kx, kq, kk, kv, ko = jax.random.split(key, 5)

    # torch nn.Linear weight layout: (out_features, in_features)
    params = {
        "q_proj": init_std * jax.random.normal(kq, (num_heads * head_dim, H), jnp.float32),
        "k_proj": init_std * jax.random.normal(kk, (num_kv_heads * head_dim, H), jnp.float32),
        "v_proj": init_std * jax.random.normal(kv, (num_kv_heads * head_dim, H), jnp.float32),
        "o_proj": init_std * jax.random.normal(ko, (H, num_heads * head_dim), jnp.float32),
    }
    # Fuse QKV weights once (parameter-load time), never transposed.
    params["qkv_proj"] = fuse_qkv_weights(params["q_proj"], params["k_proj"], params["v_proj"])

    hidden_states = jax.random.normal(kx, (B, S, H), jnp.float32)

    # Causal additive attention mask (B, 1, S, S), as the module expects.
    neg = jnp.finfo(jnp.float32).min
    causal = jnp.tril(jnp.ones((S, S), dtype=bool))
    attention_mask = jnp.where(causal, 0.0, neg).astype(jnp.float32)
    attention_mask = jnp.broadcast_to(attention_mask, (B, 1, S, S))

    out = llama_attention_forward(hidden_states, attention_mask, params, cfg)
    out = jax.block_until_ready(out)

    ref = reference_forward(hidden_states, attention_mask, params, cfg)
    ref = jax.block_until_ready(ref)

    assert out.shape == (B, S, H)
    # Tolerance covers the approximate-reciprocal softmax epilogue.
    assert jnp.allclose(out, ref, atol=2e-3, rtol=2e-3), "mismatch vs reference"

    print("KERNEL_OK")
</pallas_src>

<mosaic_0001>
module attributes {stable_mosaic.version = 11 : i64} {
  func.func @_linear_kernel(%arg0: i32, %arg1: i32, %arg2: i32, %arg3: memref<32x256xf32, #tpu.memory_space<vmem>>, %arg4: memref<256x256xf32, #tpu.memory_space<vmem>>, %arg5: memref<32x256xf32, #tpu.memory_space<vmem>>, %arg6: memref<32x256xf32, #tpu.memory_space<vmem>>) attributes {dimension_semantics = [#tpu.dimension_semantics<parallel>, #tpu.dimension_semantics<parallel>, #tpu.dimension_semantics<arbitrary>], iteration_bounds = array<i64: 1, 2, 1>, scalar_prefetch = 0 : i64, scratch_operands = 1 : i64, tpu.core_type = #tpu.core_type<tc>, window_params = [{transform_indices = @transform_0, window_bounds = array<i64: 32, 256>}, {transform_indices = @transform_1, window_bounds = array<i64: 256, 256>}, {transform_indices = @transform_2, window_bounds = array<i64: 32, 256>}]} {
    %c0_i32 = arith.constant 0 : i32
    %0 = arith.cmpi eq, %arg2, %c0_i32 : i32
    %1 = arith.extui %0 : i1 to i32
    %c0_i32_0 = arith.constant 0 : i32
    %2 = arith.cmpi ne, %1, %c0_i32_0 : i32
    scf.if %2 {
      %cst_10 = arith.constant 0.000000e+00 : f32
      %12 = vector.broadcast %cst_10 : f32 to vector<32x256xf32>
      %c0_11 = arith.constant 0 : index
      %c0_12 = arith.constant 0 : index
      %13 = vector.load %arg6[%c0_11, %c0_12] : memref<32x256xf32, #tpu.memory_space<vmem>>, vector<32x256xf32>
      tpu.vector_store %arg6[%c0_11, %c0_12], %12 {strides = array<i32>} : memref<32x256xf32, #tpu.memory_space<vmem>>, vector<32x256xf32>,
    } else {
    }
    %c0 = arith.constant 0 : index
    %c0_1 = arith.constant 0 : index
    %3 = vector.load %arg6[%c0, %c0_1] : memref<32x256xf32, #tpu.memory_space<vmem>>, vector<32x256xf32>
    %c0_2 = arith.constant 0 : index
    %c0_3 = arith.constant 0 : index
    %4 = vector.load %arg3[%c0_2, %c0_3] : memref<32x256xf32, #tpu.memory_space<vmem>>, vector<32x256xf32>
    %c0_4 = arith.constant 0 : index
    %c0_5 = arith.constant 0 : index
    %5 = vector.load %arg4[%c0_4, %c0_5] : memref<256x256xf32, #tpu.memory_space<vmem>>, vector<256x256xf32>
    %cst = arith.constant dense<0.000000e+00> : vector<32x256xf32>
    %6 = tpu.matmul %4, %5, %cst {dimension_numbers = #tpu.dot_dimension_numbers<[1], [1], [0], [0], [0, 0, 1, 0], [], []>} : vector<32x256xf32>, vector<256x256xf32>, vector<32x256xf32> -> vector<32x256xf32>
    %7 = arith.addf %3, %6 : vector<32x256xf32>
    %c0_6 = arith.constant 0 : index
    %c0_7 = arith.constant 0 : index
    %8 = vector.load %arg6[%c0_6, %c0_7] : memref<32x256xf32, #tpu.memory_space<vmem>>, vector<32x256xf32>
    tpu.vector_store %arg6[%c0_6, %c0_7], %7 {strides = array<i32>} : memref<32x256xf32, #tpu.memory_space<vmem>>, vector<32x256xf32>,
    %c0_i32_8 = arith.constant 0 : i32
    %9 = arith.cmpi eq, %arg2, %c0_i32_8 : i32
    %10 = arith.extui %9 : i1 to i32
    %c0_i32_9 = arith.constant 0 : i32
    %11 = arith.cmpi ne, %10, %c0_i32_9 : i32
    scf.if %11 {
      %c0_10 = arith.constant 0 : index
      %c0_11 = arith.constant 0 : index
      %12 = vector.load %arg6[%c0_10, %c0_11] : memref<32x256xf32, #tpu.memory_space<vmem>>, vector<32x256xf32>
      %c0_12 = arith.constant 0 : index
      %c0_13 = arith.constant 0 : index
      %13 = vector.load %arg5[%c0_12, %c0_13] : memref<32x256xf32, #tpu.memory_space<vmem>>, vector<32x256xf32>
      tpu.vector_store %arg5[%c0_12, %c0_13], %12 {strides = array<i32>} : memref<32x256xf32, #tpu.memory_space<vmem>>, vector<32x256xf32>,
    } else {
    }
    return
  }
  func.func @transform_0(%arg0: i32, %arg1: i32, %arg2: i32) -> (i32, i32) {
    %c0_i32 = arith.constant 0 : i32
    return %arg0, %arg2 : i32, i32
  }
  func.func @transform_1(%arg0: i32, %arg1: i32, %arg2: i32) -> (i32, i32) {
    %c0_i32 = arith.constant 0 : i32
    return %arg1, %arg2 : i32, i32
  }
  func.func @transform_2(%arg0: i32, %arg1: i32, %arg2: i32) -> (i32, i32) {
    %c0_i32 = arith.constant 0 : i32
    return %arg0, %arg1 : i32, i32
  }
}

</mosaic_0001>

<llo_original>
// kernel: tpu_custom_call.1
$region0: #{tpu_custom_call.1}
  #allocation0 [shape = 'u32[]', space=smem, size = 0x4, offset = 0x4, fixed_abs, tag = 'smem constant byte address 0x4 - core index']
  #allocation1 [shape = 'u32[144,128]{1,0:T(1,128)}', space=vmem, size = 0x12000, scoped, tag = 'internal scratch']
  #allocation2 [shape = 'f32[32,256]{1,0:T(8,128)}', space=vmem, size = 0x8000, scoped, tag = 'scratch operand']
  %s0 = inlined_call_operand.hbm [shape: f32[32,256], index: 0, kind: input, shape index: {}]
  %s1 = inlined_call_operand.hbm [shape: f32[512,256], index: 1, kind: input, shape index: {}]
  %s2 = inlined_call_operand.hbm [shape: f32[32,512], index: 2, kind: output, shape index: {}]
  %s3 = sld [smem:[#allocation0]]
  $region57: #{tpu_custom_call.1} parent=0
    _
  %s5 = ssub.s32 1, %s3
  %s6 = scalar_select 0, %s5, %s3
  $region1: #{tpu_custom_call.1} parent=0
    #allocation3 [shape = 'u8[32768]{0}', space=vmem, size = 0x8000, scoped, tag = 'input window, operand 0, single buffered']
    #allocation4 [shape = 's32[2]{0}', space=sflag, size = 0x8, scoped, tag = 'scoped memory for tpu_custom_call.1']
    #allocation5 [shape = 's32[2]{0}', space=sflag, size = 0x8, scoped, tag = 'scoped memory for tpu_custom_call.1']
    #allocation6 [shape = 'u8[524288]{0}', space=vmem, size = 0x80000, scoped, tag = 'input window, operand 1']
    #allocation7 [shape = 's32[2]{0}', space=sflag, size = 0x8, scoped, tag = 'scoped memory for tpu_custom_call.1']
    #allocation8 [shape = 'u8[65536]{0}', space=vmem, size = 0x10000, scoped, tag = 'output window, operand 0']
    %7 = vsyncpa [#allocation4], 0
    %8 = vsyncpa [#allocation7], 0
    %s9 = scalar_lea.sflag [#allocation7], 1
    %10 = vsyncpa %s9, 0
    %11 = vsyncpa [#allocation5], 0
    %s12 = scalar_lea.sflag [#allocation5], 1
    %13 = vsyncpa %s12, 0
    loop: start=0, step=1, limit=4
    $region2: #{tpu_custom_call.1} parent=1 // loop_pre_header
      _
    $region3: #{tpu_custom_call.1} parent=1 // loop_header
      %s15 = sphi 0, %s19
      %p16 = scmp.ge.s32.totalorder %s15, 4
      %s22 = sphi 0, %s41
      %s23 = sphi 0, %s37
      %s24 = sphi 0, %s33
      %s25 = sphi 0, %s22
      %s26 = sphi 0, %s23
      %s27 = sphi 0, %s24
      %s28 = sphi 0, %s25
      %s29 = sphi 0, %s26
      %s30 = sphi 0, %s27
      %s46 = sphi 0, %s48
      %s49 = sphi 0, %s46
      %s50 = sphi 0, %s49
      %s66 = sphi 0, %s50
      %s74 = sphi 0, %s76
      %s77 = sphi 0, %s74
      %s78 = sphi 0, %s77
      %s94 = sphi 0, %s78
      %s102 = sphi 0, %s104
      %s105 = sphi 0, %s102
      %s106 = sphi 0, %s105
      %s122 = sphi 0, %s106
    $region4: #{tpu_custom_call.1} parent=1 // loop_header_branch
      %18 = sbr.rel (%p16) target = $region8
    $region5: #{tpu_custom_call.1} parent=1 // loop_body
      %s20 = ssub.s32 %s15, 1
      %s21 = ssub.s32 %s15, 2
      %s31 = sadd.s32 1, %s24
      %p32 = scmp.ge.s32.totalorder %s31, 1
      %s33 = scalar_select %p32, 0, %s31
      %s34 = sadd.s32 1, %s23
      %s35 = scalar_select %p32, %s34, %s23
      %p36 = scmp.ge.s32.totalorder %s35, 2
      %s37 = scalar_select %p36, 0, %s35
      %s38 = sadd.s32 1, %s22
      %s39 = scalar_select %p36, %s38, %s22
      %p40 = scmp.ge.s32.totalorder %s39, 1
      %s41 = scalar_select %p40, 0, %s39
      %s42 = ssub.s32 %s22, %s41
      %s43 = ssub.s32 %s24, %s33
      %s44 = sor.u32 %s42, %s43
      %p45 = scmp.eq.s32.totalorder %s44, 0
      %s47 = sadd.s32 %s46, 1
      %s48 = scalar_select %p45, %s46, %s47
      %p51 = pneg %p45
      %p52 = scmp.eq.s32.totalorder %s15, 1
      %p53 = por %p51, %p52
      %p54 = scmp.ne.s32.totalorder %s46, %s49
      %p55 = scmp.eq.s32.totalorder %s15, 0
      %p56 = por %p54, %p55
      %p57 = scmp.ne.s32.totalorder %s46, %s49
      %p58 = scmp.eq.s32.totalorder %s20, 1
      %p59 = por %p57, %p58
      %p60 = scmp.ne.s32.totalorder %s49, %s50
      %p61 = scmp.eq.s32.totalorder %s20, 0
      %p62 = por %p60, %p61
      %p63 = scmp.ne.s32.totalorder %s49, %s50
      %p64 = scmp.eq.s32.totalorder %s21, 1
      %p65 = por %p63, %p64
      %p67 = scmp.ne.s32.totalorder %s50, %s66
      %p68 = scmp.eq.s32.totalorder %s21, 0
      %p69 = por %p67, %p68
      %s70 = ssub.s32 %s23, %s37
      %s71 = ssub.s32 %s24, %s33
      %s72 = sor.u32 %s70, %s71
      %p73 = scmp.eq.s32.totalorder %s72, 0
      %s75 = sadd.s32 %s74, 1
      %s76 = scalar_select %p73, %s74, %s75
      %p79 = pneg %p73
      %p80 = scmp.eq.s32.totalorder %s15, 1
      %p81 = por %p79, %p80
      %p82 = scmp.ne.s32.totalorder %s74, %s77
      %p83 = scmp.eq.s32.totalorder %s15, 0
      %p84 = por %p82, %p83
      %p85 = scmp.ne.s32.totalorder %s74, %s77
      %p86 = scmp.eq.s32.totalorder %s20, 1
      %p87 = por %p85, %p86
      %p88 = scmp.ne.s32.totalorder %s77, %s78
      %p89 = scmp.eq.s32.totalorder %s20, 0
      %p90 = por %p88, %p89
      %p91 = scmp.ne.s32.totalorder %s77, %s78
      %p92 = scmp.eq.s32.totalorder %s21, 1
      %p93 = por %p91, %p92
      %p95 = scmp.ne.s32.totalorder %s78, %s94
      %p96 = scmp.eq.s32.totalorder %s21, 0
      %p97 = por %p95, %p96
      %s98 = ssub.s32 %s22, %s41
      %s99 = ssub.s32 %s23, %s37
      %s100 = sor.u32 %s98, %s99
      %p101 = scmp.eq.s32.totalorder %s100, 0
      %s103 = sadd.s32 %s102, 1
      %s104 = scalar_select %p101, %s102, %s103
      %p107 = pneg %p101
      %p108 = scmp.eq.s32.totalorder %s15, 1
      %p109 = por %p107, %p108
      %p110 = scmp.ne.s32.totalorder %s102, %s105
      %p111 = scmp.eq.s32.totalorder %s15, 0
      %p112 = por %p110, %p111
      %p113 = scmp.ne.s32.totalorder %s102, %s105
      %p114 = scmp.eq.s32.totalorder %s20, 1
      %p115 = por %p113, %p114
      %p116 = scmp.ne.s32.totalorder %s105, %s106
      %p117 = scmp.eq.s32.totalorder %s20, 0
      %p118 = por %p116, %p117
      %p119 = scmp.ne.s32.totalorder %s105, %s106
      %p120 = scmp.eq.s32.totalorder %s21, 1
      %p121 = por %p119, %p120
      %p123 = scmp.ne.s32.totalorder %s106, %s122
      %p124 = scmp.eq.s32.totalorder %s21, 0
      %p125 = por %p123, %p124
      %p126 = scmp.le.s32.totalorder 1, %s15
      %p127 = scmp.lt.s32.totalorder %s15, 3
      %p128 = pnand %p126, %p127
      %p129 = pneg %p128
      // Predicated region
      $region9: #{tpu_custom_call.1} parent=5 // pred_check
        _
      $region10: #{tpu_custom_call.1} parent=5 // pred_check_branch
        %131 = sbr.rel (%p128) target = $region12
      $region11: #{tpu_custom_call.1} parent=5 // pred_region
        %s132 = ssub.s32 %s15, 1
        // Predicated region
        $region13: #{tpu_custom_call.1} parent=11 // pred_check
          %p133 = pneg %p62
        $region14: #{tpu_custom_call.1} parent=11 // pred_check_branch
          %135 = sbr.rel (%p133) target = $region16
        $region15: #{tpu_custom_call.1} parent=11 // pred_region
          %s136 = smul.u32 4, %s25
          %s137 = smul.u32 2, %s27
          %s139 = ssub.s32 1024, 1024
          %140 = vsyncadd [#allocation4], %s139
          %s141 = smul.addr %s136, 2
          %s142 = sadd.s32 %s137, %s141
          %s143 = smul.addr %s142, 128
          %s144 = scalar_lea.hbm %s0, %s143
          %s145 = sshll.u32 [#allocation3], 4
          %s146 = int_to_ptr.vmem [resolvable:$true] %s145
          %151 = dma.hbm_to_vmem [thread:$0]  %s144, 1024, %s146, [#allocation4], 256, 256, 16
        $region16: #{tpu_custom_call.1} parent=11 // pred_fallthru
          _
      $region12: #{tpu_custom_call.1} parent=5 // pred_fallthru
        _
      %p152 = scmp.lt.s32.totalorder %s15, 2
      // Predicated region
      $region17: #{tpu_custom_call.1} parent=5 // pred_check
        %p153 = pneg %p152
      $region18: #{tpu_custom_call.1} parent=5 // pred_check_branch
        %155 = sbr.rel (%p153) target = $region20
      $region19: #{tpu_custom_call.1} parent=5 // pred_region
        // Predicated region
        $region21: #{tpu_custom_call.1} parent=19 // pred_check
          %p156 = pneg %p84
        $region22: #{tpu_custom_call.1} parent=19 // pred_check_branch
          %158 = sbr.rel (%p156) target = $region24
        $region23: #{tpu_custom_call.1} parent=19 // pred_region
          %s159 = sand.u32 %s74, 1
          %s160 = scalar_lea.sflag [#allocation7], %s159
          %s161 = sand.u32 %s74, 1
          %s162 = smul.addr %s161, 512
          %s163 = scalar_lea.vmem [#allocation6], %s162
          %s164 = smul.u32 32, %s23
          %s165 = smul.u32 2, %s24
          %s167 = ssub.s32 8192, 8192
          %168 = vsyncadd %s160, %s167
          %s169 = smul.addr %s164, 2
          %s170 = sadd.s32 %s165, %s169
          %s171 = smul.addr %s170, 128
          %s172 = scalar_lea.hbm %s1, %s171
          %s173 = sshll.u32 %s163, 4
          %s174 = int_to_ptr.vmem [resolvable:$true] %s173
          %179 = dma.hbm_to_vmem [thread:$0]  %s172, 8192, %s174, %s160, 256, 256, 16
        $region24: #{tpu_custom_call.1} parent=19 // pred_fallthru
          _
      $region20: #{tpu_custom_call.1} parent=5 // pred_fallthru
        _
      %p180 = scmp.le.s32.totalorder 1, %s15
      %p181 = scmp.lt.s32.totalorder %s15, 3
      %p182 = pnand %p180, %p181
      %p183 = pneg %p182
      // Predicated region
      $region25: #{tpu_custom_call.1} parent=5 // pred_check
        _
      $region26: #{tpu_custom_call.1} parent=5 // pred_check_branch
        %185 = sbr.rel (%p182) target = $region28
      $region27: #{tpu_custom_call.1} parent=5 // pred_region
        %s186 = ssub.s32 %s15, 1
        // Predicated region
        $region29: #{tpu_custom_call.1} parent=27 // pred_check
          %p187 = pneg %p62
        $region30: #{tpu_custom_call.1} parent=27 // pred_check_branch
          %189 = sbr.rel (%p187) target = $region32
        $region31: #{tpu_custom_call.1} parent=27 // pred_region
          %190 = dma.done [#allocation4], 1024
        $region32: #{tpu_custom_call.1} parent=27 // pred_fallthru
          _
        %s191 = sand.u32 %s77, 1
        %s192 = scalar_lea.sflag [#allocation7], %s191
        %s193 = sand.u32 %s77, 1
        %s194 = smul.addr %s193, 512
        %s195 = scalar_lea.vmem [#allocation6], %s194
        // Predicated region
        $region33: #{tpu_custom_call.1} parent=27 // pred_check
          %p196 = pneg %p90
        $region34: #{tpu_custom_call.1} parent=27 // pred_check_branch
          %198 = sbr.rel (%p196) target = $region36
        $region35: #{tpu_custom_call.1} parent=27 // pred_region
          %199 = dma.done %s192, 8192
        $region36: #{tpu_custom_call.1} parent=27 // pred_fallthru
          _
        %p200 = pneg %p62
        %p201 = pneg %p59
        %s202 = sand.u32 %s77, 1
        %s203 = scalar_lea.sflag [#allocation7], %s202
        %s204 = sand.u32 %s77, 1
        %s205 = smul.addr %s204, 512
        %s206 = scalar_lea.vmem [#allocation6], %s205
        %p207 = pneg %p90
        %p208 = pneg %p87
        %p209 = pneg %p118
        %p210 = pneg %p115
        %s211 = sand.u32 %s105, 1
        %s212 = scalar_lea.sflag [#allocation5], %s211
        %s213 = sand.u32 %s105, 1
        %s214 = smul.addr %s213, 64
        %s215 = scalar_lea.vmem [#allocation8], %s214
        %s216 = smul.u32 4, %s25
        %s217 = smul.u32 2, %s27
        %s218 = smul.u32 32, %s26
        %s219 = smul.u32 2, %s27
        %s220 = smul.u32 4, %s25
        %s221 = smul.u32 2, %s26
        %p222 = scmp.eq.s32.totalorder %s27, 0
        // Predicated region
        $region37: #{tpu_custom_call.1} parent=27 // pred_check
          %p223 = pneg %p222
        $region38: #{tpu_custom_call.1} parent=27 // pred_check_branch
          %225 = sbr.rel (%p223) target = $region40
        $region39: #{tpu_custom_call.1} parent=27 // pred_region
          %226 = vst [vmem:[#allocation2] sm:$0xff] 0.0
          %227 = vst [vmem:[#allocation2 + $0x8] sm:$0xff] 0.0
          %228 = vst [vmem:[#allocation2 + $0x10] sm:$0xff] 0.0
          %229 = vst [vmem:[#allocation2 + $0x18] sm:$0xff] 0.0
          %230 = vst [vmem:[#allocation2 + $0x20] sm:$0xff] 0.0
          %231 = vst [vmem:[#allocation2 + $0x28] sm:$0xff] 0.0
          %232 = vst [vmem:[#allocation2 + $0x30] sm:$0xff] 0.0
          %233 = vst [vmem:[#allocation2 + $0x38] sm:$0xff] 0.0
        $region40: #{tpu_custom_call.1} parent=27 // pred_fallthru
          _
        %v234 = vld [vmem:[#allocation2] sm:$0xff]
        %v235 = vld [vmem:[#allocation2 + $0x8] sm:$0xff]
        %v236 = vld [vmem:[#allocation2 + $0x10] sm:$0xff]
        %v237 = vld [vmem:[#allocation2 + $0x18] sm:$0xff]
        %v238 = vld [vmem:[#allocation2 + $0x20] sm:$0xff]
        %v239 = vld [vmem:[#allocation2 + $0x28] sm:$0xff]
        %v240 = vld [vmem:[#allocation2 + $0x30] sm:$0xff]
        %v241 = vld [vmem:[#allocation2 + $0x38] sm:$0xff]
        %v242 = vld [vmem:[#allocation3] sm:$0xff]
        %v243 = vld [vmem:[#allocation3 + $0x8] sm:$0xff]
        %v244 = vld [vmem:[#allocation3 + $0x10] sm:$0xff]
        %v245 = vld [vmem:[#allocation3 + $0x18] sm:$0xff]
        %v246 = vld [vmem:[#allocation3 + $0x20] sm:$0xff]
        %v247 = vld [vmem:[#allocation3 + $0x28] sm:$0xff]
        %v248 = vld [vmem:[#allocation3 + $0x30] sm:$0xff]
        %v249 = vld [vmem:[#allocation3 + $0x38] sm:$0xff]
        %v250 = vld [vmem:[%s195] sm:$0xff]
        %v251 = vld [vmem:[%s195 + $0x8] sm:$0xff]
        %v252 = vld [vmem:[%s195 + $0x10] sm:$0xff]
        %v253 = vld [vmem:[%s195 + $0x18] sm:$0xff]
        %v254 = vld [vmem:[%s195 + $0x20] sm:$0xff]
        %v255 = vld [vmem:[%s195 + $0x28] sm:$0xff]
        %v256 = vld [vmem:[%s195 + $0x30] sm:$0xff]
        %v257 = vld [vmem:[%s195 + $0x38] sm:$0xff]
        %v258 = vld [vmem:[%s195 + $0x40] sm:$0xff]
        %v259 = vld [vmem:[%s195 + $0x48] sm:$0xff]
        %v260 = vld [vmem:[%s195 + $0x50] sm:$0xff]
        %v261 = vld [vmem:[%s195 + $0x58] sm:$0xff]
        %v262 = vld [vmem:[%s195 + $0x60] sm:$0xff]
        %v263 = vld [vmem:[%s195 + $0x68] sm:$0xff]
        %v264 = vld [vmem:[%s195 + $0x70] sm:$0xff]
        %v265 = vld [vmem:[%s195 + $0x78] sm:$0xff]
        %v266 = vld [vmem:[%s195 + $0x80] sm:$0xff]
        %v267 = vld [vmem:[%s195 + $0x88] sm:$0xff]
        %v268 = vld [vmem:[%s195 + $0x90] sm:$0xff]
        %v269 = vld [vmem:[%s195 + $0x98] sm:$0xff]
        %v270 = vld [vmem:[%s195 + $0xa0] sm:$0xff]
        %v271 = vld [vmem:[%s195 + $0xa8] sm:$0xff]
        %v272 = vld [vmem:[%s195 + $0xb0] sm:$0xff]
        %v273 = vld [vmem:[%s195 + $0xb8] sm:$0xff]
        %v274 = vld [vmem:[%s195 + $0xc0] sm:$0xff]
        %v275 = vld [vmem:[%s195 + $0xc8] sm:$0xff]
        %v276 = vld [vmem:[%s195 + $0xd0] sm:$0xff]
        %v277 = vld [vmem:[%s195 + $0xd8] sm:$0xff]
        %v278 = vld [vmem:[%s195 + $0xe0] sm:$0xff]
        %v279 = vld [vmem:[%s195 + $0xe8] sm:$0xff]
        %v280 = vld [vmem:[%s195 + $0xf0] sm:$0xff]
        %v281 = vld [vmem:[%s195 + $0xf8] sm:$0xff]
        %v282 = vld [vmem:[%s195 + $0x100] sm:$0xff]
        %v283 = vld [vmem:[%s195 + $0x108] sm:$0xff]
        %v284 = vld [vmem:[%s195 + $0x110] sm:$0xff]
        %v285 = vld [vmem:[%s195 + $0x118] sm:$0xff]
        %v286 = vld [vmem:[%s195 + $0x120] sm:$0xff]
        %v287 = vld [vmem:[%s195 + $0x128] sm:$0xff]
        %v288 = vld [vmem:[%s195 + $0x130] sm:$0xff]
        %v289 = vld [vmem:[%s195 + $0x138] sm:$0xff]
        %v290 = vld [vmem:[%s195 + $0x140] sm:$0xff]
        %v291 = vld [vmem:[%s195 + $0x148] sm:$0xff]
        %v292 = vld [vmem:[%s195 + $0x150] sm:$0xff]
        %v293 = vld [vmem:[%s195 + $0x158] sm:$0xff]
        %v294 = vld [vmem:[%s195 + $0x160] sm:$0xff]
        %v295 = vld [vmem:[%s195 + $0x168] sm:$0xff]
        %v296 = vld [vmem:[%s195 + $0x170] sm:$0xff]
        %v297 = vld [vmem:[%s195 + $0x178] sm:$0xff]
        %v298 = vld [vmem:[%s195 + $0x180] sm:$0xff]
        %v299 = vld [vmem:[%s195 + $0x188] sm:$0xff]
        %v300 = vld [vmem:[%s195 + $0x190] sm:$0xff]
        %v301 = vld [vmem:[%s195 + $0x198] sm:$0xff]
        %v302 = vld [vmem:[%s195 + $0x1a0] sm:$0xff]
        %v303 = vld [vmem:[%s195 + $0x1a8] sm:$0xff]
        %v304 = vld [vmem:[%s195 + $0x1b0] sm:$0xff]
        %v305 = vld [vmem:[%s195 + $0x1b8] sm:$0xff]
        %v306 = vld [vmem:[%s195 + $0x1c0] sm:$0xff]
        %v307 = vld [vmem:[%s195 + $0x1c8] sm:$0xff]
        %v308 = vld [vmem:[%s195 + $0x1d0] sm:$0xff]
        %v309 = vld [vmem:[%s195 + $0x1d8] sm:$0xff]
        %v310 = vld [vmem:[%s195 + $0x1e0] sm:$0xff]
        %v311 = vld [vmem:[%s195 + $0x1e8] sm:$0xff]
        %v312 = vld [vmem:[%s195 + $0x1f0] sm:$0xff]
        %v313 = vld [vmem:[%s195 + $0x1f8] sm:$0xff]
        %314 = vmatprep.subr.mxu0 %v281
        %315 = vmatpush1.xpose.msra.mxu0 %v280
        %316 = vmatprep.subr.mxu0 %v279
        %317 = vmatpush1.xpose.msra.mxu0 %v278
        %318 = vmatprep.subr.mxu0 %v277
        %319 = vmatpush1.xpose.msra.mxu0 %v276
        %320 = vmatprep.subr.mxu0 %v275
        %321 = vmatpush1.xpose.msra.mxu0 %v274
        %322 = vmatprep.subr.mxu0 %v273
        %323 = vmatpush1.xpose.msra.mxu0 %v272
        %324 = vmatprep.subr.mxu0 %v271
        %325 = vmatpush1.xpose.msra.mxu0 %v270
        %326 = vmatprep.subr.mxu0 %v269
        %327 = vmatpush1.xpose.msra.mxu0 %v268
        %328 = vmatprep.subr.mxu0 %v267
        %329 = vmatpush1.xpose.msra.mxu0 %v266
        %330 = vmatprep.subr.mxu0 %v265
        %331 = vmatpush1.xpose.msra.mxu0 %v264
        %332 = vmatprep.subr.mxu0 %v263
        %333 = vmatpush1.xpose.msra.mxu0 %v262
        %334 = vmatprep.subr.mxu0 %v261
        %335 = vmatpush1.xpose.msra.mxu0 %v260
        %336 = vmatprep.subr.mxu0 %v259
        %337 = vmatpush1.xpose.msra.mxu0 %v258
        %338 = vmatprep.subr.mxu0 %v257
        %339 = vmatpush1.xpose.msra.mxu0 %v256
        %340 = vmatprep.subr.mxu0 %v255
        %341 = vmatpush1.xpose.msra.mxu0 %v254
        %342 = vmatprep.subr.mxu0 %v253
        %343 = vmatpush1.xpose.msra.mxu0 %v252
        %344 = vmatprep.subr.mxu0 %v251
        %345 = vmatpush1.xpose.msra.mxu0 %v250
        %346 = vmatprep.subr.mxu0 %v313
        %347 = vmatpush2.xpose.msra.mxu0 %v312
        %348 = vmatprep.subr.mxu0 %v311
        %349 = vmatpush2.xpose.msra.mxu0 %v310
        %350 = vmatprep.subr.mxu0 %v309
        %351 = vmatpush2.xpose.msra.mxu0 %v308
        %352 = vmatprep.subr.mxu0 %v307
        %353 = vmatpush2.xpose.msra.mxu0 %v306
        %354 = vmatprep.subr.mxu0 %v305
        %355 = vmatpush2.xpose.msra.mxu0 %v304
        %356 = vmatprep.subr.mxu0 %v303
        %357 = vmatpush2.xpose.msra.mxu0 %v302
        %358 = vmatprep.subr.mxu0 %v301
        %359 = vmatpush2.xpose.msra.mxu0 %v300
        %360 = vmatprep.subr.mxu0 %v299
        %361 = vmatpush2.xpose.msra.mxu0 %v298
        %362 = vmatprep.subr.mxu0 %v297
        %363 = vmatpush2.xpose.msra.mxu0 %v296
        %364 = vmatprep.subr.mxu0 %v295
        %365 = vmatpush2.xpose.msra.mxu0 %v294
        %366 = vmatprep.subr.mxu0 %v293
        %367 = vmatpush2.xpose.msra.mxu0 %v292
        %368 = vmatprep.subr.mxu0 %v291
        %369 = vmatpush2.xpose.msra.mxu0 %v290
        %370 = vmatprep.subr.mxu0 %v289
        %371 = vmatpush2.xpose.msra.mxu0 %v288
        %372 = vmatprep.subr.mxu0 %v287
        %373 = vmatpush2.xpose.msra.mxu0 %v286
        %374 = vmatprep.subr.mxu0 %v285
        %375 = vmatpush2.xpose.msra.mxu0 %v284
        %376 = vmatprep.subr.mxu0 %v283
        %377 = vmatpush2.xpose.msra.mxu0 %v282
        %378 = vmatprep.mubr.f32.mxu0 %v243
        %379 = vmatmul.mubr.f32.gmra.mxu0 %v242
        %v380 = vpop.f32.mrf.mxu0
        %v381 = vadd.f32 0.0, %v380
        %v382 = vpop.f32.mrf.mxu0
        %v383 = vadd.f32 0.0, %v382
        %384 = vmatprep.mubr.f32.mxu0 %v245
        %385 = vmatmul.mubr.f32.gmra.mxu0 %v244
        %v386 = vpop.f32.mrf.mxu0
        %v387 = vadd.f32 0.0, %v386
        %v388 = vpop.f32.mrf.mxu0
        %v389 = vadd.f32 0.0, %v388
        %390 = vmatprep.mubr.f32.mxu0 %v247
        %391 = vmatmul.mubr.f32.gmra.mxu0 %v246
        %v392 = vpop.f32.mrf.mxu0
        %v393 = vadd.f32 0.0, %v392
        %v394 = vpop.f32.mrf.mxu0
        %v395 = vadd.f32 0.0, %v394
        %396 = vmatprep.mubr.f32.mxu0 %v249
        %397 = vmatmul.mubr.f32.gmra.mxu0 %v248
        %v398 = vpop.f32.mrf.mxu0
        %v399 = vadd.f32 0.0, %v398
        %v400 = vpop.f32.mrf.mxu0
        %v401 = vadd.f32 0.0, %v400
        %402 = vdwg.mxu0
        %v403 = vadd.f32 %v234, %v381
        %v404 = vadd.f32 %v235, %v383
        %v405 = vadd.f32 %v236, %v387
        %v406 = vadd.f32 %v237, %v389
        %v407 = vadd.f32 %v238, %v393
        %v408 = vadd.f32 %v239, %v395
        %v409 = vadd.f32 %v240, %v399
        %v410 = vadd.f32 %v241, %v401
        %411 = vst [vmem:[#allocation2] sm:$0xff] %v403
        %412 = vst [vmem:[#allocation2 + $0x8] sm:$0xff] %v404
        %413 = vst [vmem:[#allocation2 + $0x10] sm:$0xff] %v405
        %414 = vst [vmem:[#allocation2 + $0x18] sm:$0xff] %v406
        %415 = vst [vmem:[#allocation2 + $0x20] sm:$0xff] %v407
        %416 = vst [vmem:[#allocation2 + $0x28] sm:$0xff] %v408
        %417 = vst [vmem:[#allocation2 + $0x30] sm:$0xff] %v409
        %418 = vst [vmem:[#allocation2 + $0x38] sm:$0xff] %v410
        // Predicated region
        $region41: #{tpu_custom_call.1} parent=27 // pred_check
          %p419 = pneg %p222
        $region42: #{tpu_custom_call.1} parent=27 // pred_check_branch
          %421 = sbr.rel (%p419) target = $region44
        $region43: #{tpu_custom_call.1} parent=27 // pred_region
          %v422 = vld [vmem:[#allocation2] sm:$0xff]
          %v423 = vld [vmem:[#allocation2 + $0x8] sm:$0xff]
          %v424 = vld [vmem:[#allocation2 + $0x10] sm:$0xff]
          %v425 = vld [vmem:[#allocation2 + $0x18] sm:$0xff]
          %v426 = vld [vmem:[#allocation2 + $0x20] sm:$0xff]
          %v427 = vld [vmem:[#allocation2 + $0x28] sm:$0xff]
          %v428 = vld [vmem:[#allocation2 + $0x30] sm:$0xff]
          %v429 = vld [vmem:[#allocation2 + $0x38] sm:$0xff]
          %430 = vst [vmem:[%s215] sm:$0xff] %v422
          %431 = vst [vmem:[%s215 + $0x8] sm:$0xff] %v423
          %432 = vst [vmem:[%s215 + $0x10] sm:$0xff] %v424
          %433 = vst [vmem:[%s215 + $0x18] sm:$0xff] %v425
          %434 = vst [vmem:[%s215 + $0x20] sm:$0xff] %v426
          %435 = vst [vmem:[%s215 + $0x28] sm:$0xff] %v427
          %436 = vst [vmem:[%s215 + $0x30] sm:$0xff] %v428
          %437 = vst [vmem:[%s215 + $0x38] sm:$0xff] %v429
        $region44: #{tpu_custom_call.1} parent=27 // pred_fallthru
          _
        %s438 = sand.u32 %s105, 1
        %s439 = scalar_lea.sflag [#allocation5], %s438
        %s440 = sand.u32 %s105, 1
        %s441 = smul.addr %s440, 64
        %s442 = scalar_lea.vmem [#allocation8], %s441
        // Predicated region
        $region45: #{tpu_custom_call.1} parent=27 // pred_check
          %p443 = pneg %p115
        $region46: #{tpu_custom_call.1} parent=27 // pred_check_branch
          %445 = sbr.rel (%p443) target = $region48
        $region47: #{tpu_custom_call.1} parent=27 // pred_region
          %s446 = smul.u32 4, %s25
          %s447 = smul.u32 2, %s26
          %s449 = ssub.s32 1024, 1024
          %450 = vsyncadd %s439, %s449
          %s451 = smul.addr %s446, 4
          %s452 = sadd.s32 %s447, %s451
          %s453 = smul.addr %s452, 128
          %s454 = scalar_lea.hbm %s2, %s453
          %s455 = sshll.u32 %s442, 4
          %s456 = int_to_ptr.vmem [resolvable:$true] %s455
          %461 = dma.vmem_to_hbm [thread:$0]  %s456, 1024, %s454, %s439, 256, 512, 16
        $region48: #{tpu_custom_call.1} parent=27 // pred_fallthru
          _
      $region28: #{tpu_custom_call.1} parent=5 // pred_fallthru
        _
      %p462 = scmp.le.s32.totalorder 2, %s15
      // Predicated region
      $region49: #{tpu_custom_call.1} parent=5 // pred_check
        %p463 = pneg %p462
      $region50: #{tpu_custom_call.1} parent=5 // pred_check_branch
        %465 = sbr.rel (%p463) target = $region52
      $region51: #{tpu_custom_call.1} parent=5 // pred_region
        %s466 = ssub.s32 %s15, 2
        // Predicated region
        $region53: #{tpu_custom_call.1} parent=51 // pred_check
          %p467 = pneg %p121
        $region54: #{tpu_custom_call.1} parent=51 // pred_check_branch
          %469 = sbr.rel (%p467) target = $region56
        $region55: #{tpu_custom_call.1} parent=51 // pred_region
          %s470 = sand.u32 %s106, 1
          %s471 = scalar_lea.sflag [#allocation5], %s470
          %s472 = sand.u32 %s106, 1
          %s473 = smul.addr %s472, 64
          %s474 = scalar_lea.vmem [#allocation8], %s473
          %475 = dma.done %s471, 1024
        $region56: #{tpu_custom_call.1} parent=51 // pred_fallthru
          _
      $region52: #{tpu_custom_call.1} parent=5 // pred_fallthru
        _
    $region6: #{tpu_custom_call.1} parent=1 // loop_footer
      %s19 = sadd.s32 1, %s15
    $region7: #{tpu_custom_call.1} parent=1 // loop_footer_branch
      %14 = sbr.rel target = $region3
    $region8: #{tpu_custom_call.1} parent=1 // loop_exit
      _
    %476 = vsyncpa [#allocation4], 1
    %s477 = scalar_lea.sflag [#allocation4], 1
    %478 = vsyncpa %s477, 1
    %479 = vsyncpa [#allocation7], 1
    %s480 = scalar_lea.sflag [#allocation7], 1
    %481 = vsyncpa %s480, 1
    %482 = vsyncpa [#allocation5], 1
    %s483 = scalar_lea.sflag [#allocation5], 1
    %484 = vsyncpa %s483, 1

</llo_original>
